<compile_context>
chip_gen: v7x
topology: tpu7x:2x2x1
jax: 0.10.0
libtpu: 0.0.40
codegen_flags: <defaults>
</compile_context>

<pallas_src>
import math

import jax
import jax.numpy as jnp
from jax.experimental import pallas as pl
from jax.experimental.pallas import tpu as pltpu


# Input-block byte targets (per grid step, before double buffering).
_LANE_DENSE_BLOCK_BYTES = 8 * 1024 * 1024   # lane-dense paths (W%128==0 or flat)
_FALLBACK_BLOCK_BYTES = 2 * 1024 * 1024     # odd-size, lane-masked fallback
_VMEM_LIMIT_BYTES = 40 * 1024 * 1024        # fits v7x (64 MiB) and v5e/v6e


def _round_up(x: int, m: int) -> int:
    return ((x + m - 1) // m) * m


def _make_decode_kernel(threshold: float, out_dtype):
    """Build the decode kernel body (threshold folded at trace time)."""
    use_logit = 0.0 < threshold < 1.0
    logit_thr = math.log(threshold / (1.0 - threshold)) if use_logit else 0.0

    def kernel(x_ref, o_ref):
        # x_ref: (block_b, 1, block_r, cols) block of channel-0 logits
        # o_ref: (block_b, block_r, cols)    block of the output mask
        x = x_ref[...][:, 0]                 # drop the size-1 channel dim
        if use_logit:
            # sigmoid is monotonic: sigmoid(x) >= t  <=>  x >= logit(t).
            # Compare in the native input dtype (bf16 stays bf16): saves the
            # f32 upcast; only logits within rounding of the boundary differ,
            # and t == 0.5 (logit 0) is exact in every float dtype.
            mask = x >= jnp.asarray(logit_thr, dtype=x.dtype)
        else:
            # Degenerate thresholds: keep exact sigmoid-compare semantics
            # (incl. f32 saturation to 1.0 for large logits when t == 1).
            mask = jax.nn.sigmoid(x.astype(jnp.float32)) >= jnp.float32(threshold)
        o_ref[...] = mask.astype(out_dtype)

    return kernel


def _choose_blocks(B, R, cols, in_itemsize, target_bytes):
    """Pick (block_b, block_r) so each input block is ~target_bytes.

    Small images: batch several whole channel-0 images per block (amortizes
    per-grid-step overhead).  Large images: one image per batch block, rows
    tiled in multiples of 8 with a balanced tail tile.
    """
    row_bytes = cols * in_itemsize
    image_bytes = R * row_bytes
    if image_bytes <= target_bytes:
        block_r = R
        block_b = max(1, min(B, target_bytes // max(image_bytes, 1)))
        # Balance batch tiles so the last one is not nearly empty.
        block_b = pl.cdiv(B, pl.cdiv(B, block_b))
    else:
        block_b = 1
        max_r = max(8, (target_bytes // max(row_bytes, 1)) // 8 * 8)
        n_tiles = pl.cdiv(R, max_r)
        block_r = _round_up(pl.cdiv(R, n_tiles), 8)   # balanced, multiple of 8
        if block_r >= R:
            block_r = R
    return block_b, block_r


def _decode_pallas_call(x, R, cols, block_b, block_r, kernel, out_dtype, cost):
    """x: (B, C, R, cols) -> (B, R, cols) mask, only channel 0 is DMA'd."""
    B = x.shape[0]
    grid = (pl.cdiv(B, block_b), pl.cdiv(R, block_r))
    return pl.pallas_call(
        kernel,
        out_shape=jax.ShapeDtypeStruct((B, R, cols), out_dtype),
        grid=grid,
        in_specs=[
            # Only channel 0 of each batch element ever leaves HBM.
            pl.BlockSpec((block_b, 1, block_r, cols),
                         lambda b, t: (b, 0, t, 0)),
        ],
        out_specs=pl.BlockSpec((block_b, block_r, cols),
                               lambda b, t: (b, t, 0)),
        compiler_params=pltpu.CompilerParams(
            dimension_semantics=("parallel", "parallel"),
            vmem_limit_bytes=_VMEM_LIMIT_BYTES,
        ),
        cost_estimate=cost,
    )(x)


def binary_segmentation_decode(predictions, threshold: float = 0.5,
                               out_dtype=jnp.int8,
                               lane_block_bytes: int = _LANE_DENSE_BLOCK_BYTES,
                               fallback_block_bytes: int = _FALLBACK_BLOCK_BYTES):
    """Pallas implementation of BinarySegmentationDecodingModule.forward.

    :param predictions: [B, C, H, W] logits tensor (f32 or bf16), or a
                        tuple/list whose first element is that tensor.
    :param threshold:   probability threshold for the hard binary mask.
    :param out_dtype:   dtype of the 0/1 mask (int8 default for bandwidth;
                        jnp.int32 for a wider output).
    :param lane_block_bytes / fallback_block_bytes: input-block byte budgets
                        (exposed mainly so tests can force multi-step grids).
    :return: [B, H, W] tensor with values 0/1.
    """
    if isinstance(predictions, (list, tuple)):
        predictions = predictions[0]
    B, C, H, W = predictions.shape

    kernel = _make_decode_kernel(threshold, out_dtype)
    use_logit = 0.0 < threshold < 1.0

    n_pix = B * H * W
    in_itemsize = jnp.dtype(predictions.dtype).itemsize
    out_itemsize = jnp.dtype(out_dtype).itemsize
    cost = pl.CostEstimate(
        flops=n_pix,
        transcendentals=0 if use_logit else n_pix,
        bytes_accessed=n_pix * (in_itemsize + out_itemsize),
    )

    if W % 128 == 0:
        # Lane-dense on the native layout: no wrapper reshape, tile H directly.
        block_b, block_h = _choose_blocks(B, H, W, in_itemsize, lane_block_bytes)
        return _decode_pallas_call(predictions, H, W, block_b, block_h,
                                   kernel, out_dtype, cost)

    if (H * W) % 128 == 0:
        # Lane-dense via flattening H*W -> (rows, 128).  Free for the default
        # row-major layout; only the channel-0 plane is DMA'd either way.
        rows = (H * W) // 128
        x = predictions.reshape(B, C, rows, 128)
        block_b, block_r = _choose_blocks(B, rows, 128, in_itemsize,
                                          lane_block_bytes)
        out = _decode_pallas_call(x, rows, 128, block_b, block_r,
                                  kernel, out_dtype, cost)
        return out.reshape(B, H, W)

    # Odd spatial sizes: tile H in multiples of 8 with a ~2 MiB budget so large
    # odd images never exceed VMEM; stores are lane-masked (W < 128 multiple)
    # but correct.
    block_b, block_h = _choose_blocks(B, H, W, in_itemsize, fallback_block_bytes)
    return _decode_pallas_call(predictions, H, W, block_b, block_h,
                               kernel, out_dtype, cost)


def _reference_decode(predictions, threshold: float = 0.5):
    """Pure-JAX reference (sigmoid compare in f32)."""
    if isinstance(predictions, (list, tuple)):
        predictions = predictions[0]
    logits = predictions[:, 0].astype(jnp.float32)
    return (jax.nn.sigmoid(logits) >= threshold).astype(jnp.int32)


if __name__ == "__main__":
    key = jax.random.PRNGKey(0)
    k1, k2, k3, k4, k5, k6 = jax.random.split(key, 6)

    # Primary test: module-default-ish shapes, f32 logits, tuple input.
    B, C, H, W = 2, 4, 16, 16
    logits = jax.random.normal(k1, (B, C, H, W), dtype=jnp.float32)

    out = jax.block_until_ready(binary_segmentation_decode((logits,), 0.5))
    ref = _reference_decode(logits, 0.5)
    assert out.shape == (B, H, W), out.shape
    assert out.dtype == jnp.int8, out.dtype
    assert bool(jnp.all(out.astype(jnp.int32) == ref)), "int8 path mismatch"

    # Wider-output flag (closer to torch .long()).
    out32 = jax.block_until_ready(
        binary_segmentation_decode(logits, 0.5, out_dtype=jnp.int32))
    assert out32.dtype == jnp.int32
    assert bool(jnp.all(out32 == ref)), "int32 path mismatch"

    # bf16 logits, W % 128 == 0 -> native-layout lane-dense path (no reshape).
    logits_bf16 = jax.random.normal(k2, (1, 2, 8, 128)).astype(jnp.bfloat16)
    out_bf = jax.block_until_ready(binary_segmentation_decode(logits_bf16, 0.5))
    ref_bf = _reference_decode(logits_bf16, 0.5)
    assert out_bf.shape == (1, 8, 128)
    assert bool(jnp.all(out_bf.astype(jnp.int32) == ref_bf)), "bf16 path mismatch"

    # Odd spatial size (H*W % 128 != 0) -> H-tiled fallback path.
    logits_odd = jax.random.normal(k3, (2, 3, 12, 10), dtype=jnp.float32)
    out_odd = jax.block_until_ready(binary_segmentation_decode(logits_odd, 0.5))
    ref_odd = _reference_decode(logits_odd, 0.5)
    assert out_odd.shape == (2, 12, 10)
    assert bool(jnp.all(out_odd.astype(jnp.int32) == ref_odd)), "fallback mismatch"

    # Force multi-step grids on small shapes (validates index_maps / padding):
    # 1) row tiling on the native lane-dense path (grid = (3, 4)).
    logits_tile = jax.random.normal(k4, (3, 2, 32, 128), dtype=jnp.float32)
    out_tile = jax.block_until_ready(
        binary_segmentation_decode(logits_tile, 0.5, lane_block_bytes=4096))
    assert bool(jnp.all(out_tile.astype(jnp.int32)
                        == _reference_decode(logits_tile, 0.5))), "row-tiled mismatch"

    # 2) batch blocking with a partial last batch tile (B=5, block_b=2).
    logits_batch = jax.random.normal(k5, (5, 3, 8, 128), dtype=jnp.float32)
    out_batch = jax.block_until_ready(
        binary_segmentation_decode(logits_batch, 0.5, lane_block_bytes=8192))
    assert bool(jnp.all(out_batch.astype(jnp.int32)
                        == _reference_decode(logits_batch, 0.5))), "batch-blocked mismatch"

    # 3) H-tiled odd-size fallback with a partial last row tile.
    logits_odd_t = jax.random.normal(k6, (1, 2, 20, 10), dtype=jnp.float32)
    out_odd_t = jax.block_until_ready(
        binary_segmentation_decode(logits_odd_t, 0.5, fallback_block_bytes=400))
    assert bool(jnp.all(out_odd_t.astype(jnp.int32)
                        == _reference_decode(logits_odd_t, 0.5))), "odd-tiled mismatch"

    print("KERNEL_OK")
</pallas_src>

<mosaic_0001>
module attributes {stable_mosaic.version = 11 : i64} {
  func.func @kernel(%arg0: i32, %arg1: i32, %arg2: memref<2x1x2x128xf32, #tpu.memory_space<vmem>>, %arg3: memref<2x2x128xi8, #tpu.memory_space<vmem>>) attributes {dimension_semantics = [#tpu.dimension_semantics<parallel>, #tpu.dimension_semantics<parallel>], iteration_bounds = array<i64: 1, 1>, scalar_prefetch = 0 : i64, scratch_operands = 0 : i64, tpu.core_type = #tpu.core_type<tc>, window_params = [{transform_indices = @transform_0, window_bounds = array<i64: 2, 1, 2, 128>}, {transform_indices = @transform_1, window_bounds = array<i64: 2, 2, 128>}]} {
    %c0 = arith.constant 0 : index
    %c0_0 = arith.constant 0 : index
    %c0_1 = arith.constant 0 : index
    %c0_2 = arith.constant 0 : index
    %0 = vector.load %arg2[%c0, %c0_0, %c0_1, %c0_2] : memref<2x1x2x128xf32, #tpu.memory_space<vmem>>, vector<2x1x2x128xf32>
    %1 = vector.shape_cast %0 : vector<2x1x2x128xf32> to vector<2x2x128xf32>
    %cst = arith.constant 0.000000e+00 : f32
    %2 = vector.broadcast %cst : f32 to vector<2x2x128xf32>
    %3 = arith.cmpf oge, %1, %2 : vector<2x2x128xf32>
    %4 = arith.extui %3 : vector<2x2x128xi1> to vector<2x2x128xi8>
    %c0_3 = arith.constant 0 : index
    %c0_4 = arith.constant 0 : index
    %c0_5 = arith.constant 0 : index
    %5 = vector.load %arg3[%c0_3, %c0_4, %c0_5] : memref<2x2x128xi8, #tpu.memory_space<vmem>>, vector<2x2x128xi8>
    tpu.vector_store %arg3[%c0_3, %c0_4, %c0_5], %4 {strides = array<i32>} : memref<2x2x128xi8, #tpu.memory_space<vmem>>, vector<2x2x128xi8>,
    return
  }
  func.func @transform_0(%arg0: i32, %arg1: i32) -> (i32, i32, i32, i32) {
    %c0_i32 = arith.constant 0 : i32
    %c0_i32_0 = arith.constant 0 : i32
    %c0_i32_1 = arith.constant 0 : i32
    return %arg0, %c0_i32, %arg1, %c0_i32_0 : i32, i32, i32, i32
  }
  func.func @transform_1(%arg0: i32, %arg1: i32) -> (i32, i32, i32) {
    %c0_i32 = arith.constant 0 : i32
    %c0_i32_0 = arith.constant 0 : i32
    return %arg0, %arg1, %c0_i32 : i32, i32, i32
  }
}

</mosaic_0001>

<llo_original>
// kernel: tpu_custom_call.1
$region0: #{tpu_custom_call.1}
  #allocation0 [shape = 'u32[]', space=smem, size = 0x4, offset = 0x4, fixed_abs, tag = 'smem constant byte address 0x4 - core index']
  #allocation1 [shape = 'u32[144,128]{1,0:T(1,128)}', space=vmem, size = 0x12000, scoped, tag = 'internal scratch']
  %s0 = inlined_call_operand.hbm [shape: f32[2,4,2,128], index: 0, kind: input, shape index: {}]
  %s1 = inlined_call_operand.hbm [shape: s8[2,2,128], index: 1, kind: output, shape index: {}]
  %s2 = sld [smem:[#allocation0]]
  $region18: #{tpu_custom_call.1} parent=0
    _
  %s4 = ssub.s32 1, %s2
  %s5 = scalar_select 0, %s4, %s2
  $region1: #{tpu_custom_call.1} parent=0
    #allocation2 [shape = 'u8[2048]{0}', space=vmem, size = 0x800, scoped, tag = 'input window, operand 0, single buffered']
    #allocation3 [shape = 's32[1]{0}', space=sflag, size = 0x4, scoped, tag = 'scoped memory for tpu_custom_call.1']
    #allocation4 [shape = 's32[1]{0}', space=sflag, size = 0x4, scoped, tag = 'scoped memory for tpu_custom_call.1']
    #allocation5 [shape = 'u8[1024]{0}', space=vmem, size = 0x400, scoped, tag = 'output window, operand 0, single buffered']
    %6 = vsyncpa [#allocation3], 0
    %7 = vsyncpa [#allocation4], 0
    // Predicated region
    $region2: #{tpu_custom_call.1} parent=1 // pred_check
      _
    $region3: #{tpu_custom_call.1} parent=1 // pred_check_branch
      %9 = sbr.rel (0) target = $region5
    $region4: #{tpu_custom_call.1} parent=1 // pred_region
      %s11 = ssub.s32 64, 64
      %12 = vsyncadd [#allocation3], %s11
      %s13 = sshll.u32 [#allocation2], 4
      %s14 = int_to_ptr.vmem [resolvable:$true] %s13
      %19 = dma.hbm_to_vmem [thread:$0]  %s0, 64, %s14, [#allocation3], 128, 32, 2
    $region5: #{tpu_custom_call.1} parent=1 // pred_fallthru
      _
    // Predicated region
    $region6: #{tpu_custom_call.1} parent=1 // pred_check
      _
    $region7: #{tpu_custom_call.1} parent=1 // pred_check_branch
      %21 = sbr.rel (0) target = $region9
    $region8: #{tpu_custom_call.1} parent=1 // pred_region
      %22 = dma.done [#allocation3], 64
    $region9: #{tpu_custom_call.1} parent=1 // pred_fallthru
      _
    %v25 = vld [vmem:[#allocation2] sm:$0x3]
    %v26 = vld [vmem:[#allocation2 + $0x2] sm:$0x3]
    %vm27 = vcmp.ge.f32.partialorder %v25, 0.0
    %vm28 = vcmp.ge.f32.partialorder %v26, 0.0
    %vm29 = vmpackc.low %vm27, %vm27
    %vm30 = vmpackc.even %vm29, %vm29
    %vm31 = vmpackc.low %vm28, %vm28
    %vm32 = vmpackc.even %vm31, %vm31
    %v33 = vsel %vm30, 16843009, 0
    %v34 = vsel %vm32, 16843009, 0
    %vm35 = vcmask 1040384
    %vm36 = vsmask.f32 256
    %vm37 = vmand %vm35, %vm36
    %v38 = vld [vmem:[#allocation5] sm:$0x1]
    %v39 = vsel %vm37, %v33, %v38
    %40 = vst [vmem:[#allocation5] sm:$0x1] %v39
    %v41 = vld [vmem:[#allocation5 + $0x1] sm:$0x1]
    %v42 = vsel %vm37, %v34, %v41
    %43 = vst [vmem:[#allocation5 + $0x1] sm:$0x1] %v42
    // Predicated region
    $region10: #{tpu_custom_call.1} parent=1 // pred_check
      _
    $region11: #{tpu_custom_call.1} parent=1 // pred_check_branch
      %45 = sbr.rel (0) target = $region13
    $region12: #{tpu_custom_call.1} parent=1 // pred_region
      %s47 = ssub.s32 32, 32
      %48 = vsyncadd [#allocation4], %s47
      %s49 = sshll.u32 [#allocation5], 4
      %s50 = int_to_ptr.vmem [resolvable:$true] %s49
      %55 = dma.vmem_to_hbm [thread:$0]  %s50, 32, %s1, [#allocation4], 16, 16, 1
    $region13: #{tpu_custom_call.1} parent=1 // pred_fallthru
      _
    // Predicated region
    $region14: #{tpu_custom_call.1} parent=1 // pred_check
      _
    $region15: #{tpu_custom_call.1} parent=1 // pred_check_branch
      %57 = sbr.rel (0) target = $region17
    $region16: #{tpu_custom_call.1} parent=1 // pred_region
      %58 = dma.done [#allocation4], 32
    $region17: #{tpu_custom_call.1} parent=1 // pred_fallthru
      _
    %59 = vsyncpa [#allocation3], 1
    %60 = vsyncpa [#allocation4], 1

</llo_original>
